<compile_context>
chip_gen: v7x
topology: tpu7x:2x2x1
jax: 0.10.0
libtpu: 0.0.40
codegen_flags: <defaults>
</compile_context>

<pallas_src>
import jax
import jax.numpy as jnp
from jax.experimental import pallas as pl
from jax.experimental.pallas import tpu as pltpu


# ----------------------------- model dims -----------------------------------
B = 2        # batch
N = 8        # tokens (sequence length)
D = 32       # embedding dim
H = 4        # num_heads
DH = D // H  # head dim
MLP_RATIO = 4.0
DM = int(D * MLP_RATIO)  # 128
R = B * N                # folded row axis (16)
HR = H * R               # packed head*row axis (64)
EPS = 1e-5               # PyTorch LayerNorm default eps
INV_SQRT2 = 0.7071067811865476

# ----------------------------- slab row layout (lane width 128) --------------
QKVO_OFF = 0             # (D, 4D)  = [Wq | Wk | Wv | Wo]
W1_OFF = QKVO_OFF + D    # (D, DM)
W2T_OFF = W1_OFF + D     # (D, DM)  = W2 transposed (used via dot_general)
A_OFF = W2T_OFF + D      # (D, D)   head block-averaging matrix (lanes 0:D)
HM_OFF = A_OFF + D       # (HR, D)  head block mask (lanes 0:D)
AM_OFF = HM_OFF + HR     # (R, HR)  additive 0/-1e30 batch mask (lanes 0:HR)
VEC_OFF = AM_OFF + R     # (11, 128) packed 1-D params
N_VEC = 11
SLAB_ROWS = 224          # VEC_OFF + N_VEC = 219, padded to a multiple of 8


def _layer_norm_1pass(x, w, b, inv_dim):
    # Single pass: var = E[x^2] - mu^2 (biased, matches PyTorch LayerNorm).
    s1 = jnp.sum(x, axis=-1, keepdims=True)
    s2 = jnp.sum(x * x, axis=-1, keepdims=True)
    mu = s1 * inv_dim
    var = s2 * inv_dim - mu * mu
    return (x - mu) * jax.lax.rsqrt(var + EPS) * w + b


def _gelu_exact(x):
    # nn.GELU() default: exact erf formulation.
    return 0.5 * x * (1.0 + jax.lax.erf(x * INV_SQRT2))


def _rep_rows(t, n):
    # explicit sublane-axis repeat (clearly supported concat lowering)
    return jnp.concatenate([t] * n, axis=0)


def encoder_block_kernel(x_ref, wb_ref, o_ref):
    x = x_ref[...]                               # (R, D)

    vecs = wb_ref[VEC_OFF:VEC_OFF + N_VEC, :]    # (11, 128)
    ln1_w = vecs[0, :D]
    ln1_b = vecs[1, :D]
    qn_w = vecs[2, :D]       # per-head qk-norm weight, tiled to D, * DH**-0.5
    qn_b = vecs[3, :D]       # per-head qk-norm bias,  tiled to D, * DH**-0.5
    kn_w = vecs[4, :D]
    kn_b = vecs[5, :D]
    bo = vecs[6, :D]
    ln2_w = vecs[7, :D]
    ln2_b = vecs[8, :D]
    b2 = vecs[9, :D]
    b1 = vecs[10, :]         # (DM,) = (128,)

    inv_d = jnp.float32(1.0 / D)

    # ---- norm1 + fused QKV(+O, unused lanes) projection: 1 matmul ----------
    h1 = _layer_norm_1pass(x, ln1_w, ln1_b, inv_d)
    w_qkvo = wb_ref[QKVO_OFF:QKVO_OFF + D, :]                       # (D, 4D)
    qkvx = jnp.dot(h1, w_qkvo, preferred_element_type=jnp.float32)  # (R, 4D)
    q = qkvx[:, 0:D]
    k = qkvx[:, D:2 * D]
    v = qkvx[:, 2 * D:3 * D]

    # ---- per-head qk LayerNorm moments: ONE matmul vs precomputed A --------
    a_avg = wb_ref[A_OFF:A_OFF + D, 0:D]                            # (D, D)
    stacked = jnp.concatenate([q, k, q * q, k * k], axis=0)         # (4R, D)
    mom = jnp.dot(stacked, a_avg, preferred_element_type=jnp.float32)
    mu_q = mom[0:R]
    mu_k = mom[R:2 * R]
    m2_q = mom[2 * R:3 * R]
    m2_k = mom[3 * R:4 * R]
    # attention scale DH**-0.5 already folded into qn_w / qn_b host-side
    qn = (q - mu_q) * jax.lax.rsqrt(m2_q - mu_q * mu_q + EPS) * qn_w + qn_b
    kn = (k - mu_k) * jax.lax.rsqrt(m2_k - mu_k * mu_k + EPS) * kn_w + kn_b

    # ---- attention: all heads batched into packed lane axis ----------------
    hm = wb_ref[HM_OFF:HM_OFF + HR, 0:D]         # (HR, D) head block mask
    amask = wb_ref[AM_OFF:AM_OFF + R, 0:HR]      # (R, HR) additive batch mask

    kn_rep = _rep_rows(kn, H) * hm               # (HR, D)
    v_rep = _rep_rows(v, H) * hm                 # (HR, D)

    # packed scores S[r, h*R + r'] = <q_h[r], k_h[r']>   (1 matmul)
    s = jax.lax.dot_general(qn, kn_rep, (((1,), (1,)), ((), ())),
                            preferred_element_type=jnp.float32) + amask
    # row-global max is a per-row constant -> per-head softmax unchanged
    s = s - jnp.max(s, axis=-1, keepdims=True)
    p = jnp.exp(s)                               # (R, HR)

    # fused [per-head denominator | P @ V] in one matmul
    dv = jnp.concatenate([hm, v_rep], axis=1)    # (HR, 2D)
    pv = jnp.dot(p, dv, preferred_element_type=jnp.float32)   # (R, 2D)
    denom = pv[:, 0:D]
    hv = pv[:, D:2 * D]
    attn = hv / denom                            # exact normalization

    # single output projection for all heads (1 matmul)
    wo = w_qkvo[:, 3 * D:4 * D]                  # (D, D)
    x1 = x + jnp.dot(attn, wo, preferred_element_type=jnp.float32) + bo

    # ---- norm2 + feed forward ------------------------------------------------
    h2 = _layer_norm_1pass(x1, ln2_w, ln2_b, inv_d)
    w1 = wb_ref[W1_OFF:W1_OFF + D, :]                               # (D, DM)
    f = jnp.dot(h2, w1, preferred_element_type=jnp.float32) + b1
    f = _gelu_exact(f)
    w2t = wb_ref[W2T_OFF:W2T_OFF + D, :]                            # (D, DM)
    f = jax.lax.dot_general(f, w2t, (((1,), (1,)), ((), ())),
                            preferred_element_type=jnp.float32) + b2

    o_ref[...] = (x1 + f).astype(o_ref.dtype)


# ----------------------------- host-side packing ------------------------------
def _pack_params(p):
    """Pack everything into one (SLAB_ROWS, 128) f32 slab (single DMA)."""
    f32 = jnp.float32
    scale = jnp.float32(DH ** -0.5)

    wqkvo = jnp.concatenate([p["wq"], p["wk"], p["wv"], p["wo"]], axis=1)  # (D,4D)
    w1 = p["w1"].astype(f32)                        # (D, DM)
    w2t = p["w2"].T.astype(f32)                     # (D, DM)

    d_ids = jnp.arange(D)
    # head block-averaging matrix: A[d, d'] = 1/DH if same head block
    a_avg = ((d_ids[:, None] // DH) == (d_ids[None, :] // DH)).astype(f32) / DH
    a_blk = jnp.zeros((D, 128), f32).at[:, :D].set(a_avg)

    # head block mask: hm[h*R + r, d] = 1 iff d belongs to head h
    hm = ((jnp.arange(HR)[:, None] // R) == (d_ids[None, :] // DH)).astype(f32)
    hm_blk = jnp.zeros((HR, 128), f32).at[:, :D].set(hm)

    # additive batch mask (0 same-batch, -1e30 cross-batch), tiled across heads
    row_b = jnp.arange(R) // N
    bm = row_b[:, None] == row_b[None, :]
    amask = jnp.tile(jnp.where(bm, 0.0, -1e30).astype(f32), (1, H))   # (R, HR)
    amask_blk = jnp.zeros((R, 128), f32).at[:, :HR].set(amask)

    def pad128(v):
        v = v.reshape(-1).astype(f32)
        return jnp.pad(v, (0, 128 - v.shape[0]))

    rows = [
        p["ln1_w"], p["ln1_b"],
        jnp.tile(p["qn_w"].reshape(-1), H) * scale,   # fold attention scale
        jnp.tile(p["qn_b"].reshape(-1), H) * scale,
        jnp.tile(p["kn_w"].reshape(-1), H),
        jnp.tile(p["kn_b"].reshape(-1), H),
        p["bo"], p["ln2_w"], p["ln2_b"], p["b2"], p["b1"],
    ]
    vecs = jnp.stack([pad128(r) for r in rows], axis=0)               # (11,128)

    slab = jnp.concatenate(
        [wqkvo.astype(f32), w1, w2t, a_blk, hm_blk, amask_blk, vecs,
         jnp.zeros((SLAB_ROWS - (VEC_OFF + N_VEC), 128), f32)], axis=0)
    return slab


def encoder_block(x, params):
    """x: (B, N, D) f32. params: dict of weights (see init_params)."""
    slab = _pack_params(params)
    xr = x.reshape(R, D)          # fold batch x tokens into one row axis

    vm = pl.BlockSpec(memory_space=pltpu.MemorySpace.VMEM)
    out = pl.pallas_call(
        encoder_block_kernel,
        out_shape=jax.ShapeDtypeStruct((R, D), jnp.float32),
        in_specs=[vm, vm],
        out_specs=vm,
    )(xr, slab)
    return out.reshape(B, N, D)


# ----------------------------- reference (pure JAX) --------------------------
def _layer_norm_ref(x, w, b):
    mu = jnp.mean(x, axis=-1, keepdims=True)
    var = jnp.mean((x - mu) ** 2, axis=-1, keepdims=True)
    return (x - mu) * jax.lax.rsqrt(var + EPS) * w + b


def encoder_block_ref(x, p):
    h = _layer_norm_ref(x, p["ln1_w"], p["ln1_b"])
    q = h @ p["wq"]
    k = h @ p["wk"]
    v = h @ p["wv"]
    qh = q.reshape(B, N, H, DH).transpose(0, 2, 1, 3)
    kh = k.reshape(B, N, H, DH).transpose(0, 2, 1, 3)
    vh = v.reshape(B, N, H, DH).transpose(0, 2, 1, 3)
    qh = _layer_norm_ref(qh, p["qn_w"][0], p["qn_b"][0]) * (DH ** -0.5)
    kh = _layer_norm_ref(kh, p["kn_w"][0], p["kn_b"][0])
    s = jnp.einsum("bhqd,bhkd->bhqk", qh, kh)
    pattn = jax.nn.softmax(s, axis=-1)
    o = jnp.einsum("bhqk,bhkd->bhqd", pattn, vh)
    o = o.transpose(0, 2, 1, 3).reshape(B, N, D)
    o = o @ p["wo"] + p["bo"][0]
    x1 = x + o
    h2 = _layer_norm_ref(x1, p["ln2_w"], p["ln2_b"])
    f = _gelu_exact(h2 @ p["w1"] + p["b1"][0]) @ p["w2"] + p["b2"][0]
    return x1 + f


# ----------------------------- param init ------------------------------------
def init_params(key):
    ks = jax.random.split(key, 17)
    s = 0.02

    def rn(k, shape):
        return s * jax.random.normal(k, shape, jnp.float32)

    def small(k, shape):
        return 0.1 * jax.random.normal(k, shape, jnp.float32)

    # LN/qk-norm params randomized (rather than default ones/zeros) so the
    # in-kernel packing/tiling is actually exercised by the check.
    return {
        "ln1_w": 1.0 + small(ks[6], (1, D)),
        "ln1_b": small(ks[7], (1, D)),
        "wq": rn(ks[0], (D, D)),
        "wk": rn(ks[1], (D, D)),
        "wv": rn(ks[2], (D, D)),
        "qn_w": 1.0 + small(ks[8], (1, DH)),
        "qn_b": small(ks[9], (1, DH)),
        "kn_w": 1.0 + small(ks[10], (1, DH)),
        "kn_b": small(ks[11], (1, DH)),
        "wo": rn(ks[3], (D, D)),
        "bo": small(ks[12], (1, D)),
        "ln2_w": 1.0 + small(ks[13], (1, D)),
        "ln2_b": small(ks[14], (1, D)),
        "w1": rn(ks[4], (D, DM)),
        "b1": small(ks[15], (1, DM)),
        "w2": rn(ks[5], (DM, D)),
        "b2": small(ks[16], (1, D)),
    }


if __name__ == "__main__":
    key = jax.random.PRNGKey(0)
    kx, kp = jax.random.split(key)
    x = jax.random.normal(kx, (B, N, D), jnp.float32)
    params = init_params(kp)

    out = jax.block_until_ready(encoder_block(x, params))
    ref = jax.block_until_ready(encoder_block_ref(x, params))

    assert out.shape == (B, N, D)
    err = float(jnp.max(jnp.abs(out - ref)))
    assert jnp.allclose(out, ref, atol=1e-4, rtol=1e-4), err
    print("KERNEL_OK")
</pallas_src>

<mosaic_0001>
module attributes {stable_mosaic.version = 11 : i64} {
  func.func @encoder_block_kernel(%arg0: memref<16x32xf32, #tpu.memory_space<vmem>>, %arg1: memref<224x128xf32, #tpu.memory_space<vmem>>, %arg2: memref<16x32xf32, #tpu.memory_space<vmem>>) attributes {dimension_semantics = [], scalar_prefetch = 0 : i64, scratch_operands = 0 : i64, tpu.core_type = #tpu.core_type<tc>} {
    %c0 = arith.constant 0 : index
    %c0_0 = arith.constant 0 : index
    %0 = vector.load %arg0[%c0, %c0_0] : memref<16x32xf32, #tpu.memory_space<vmem>>, vector<16x32xf32>
    %c208 = arith.constant 208 : index
    %c0_1 = arith.constant 0 : index
    %1 = vector.load %arg1[%c208, %c0_1] : memref<224x128xf32, #tpu.memory_space<vmem>>, vector<11x128xf32>
    %2 = vector.extract_strided_slice %1 {offsets = [0, 0], sizes = [1, 32], strides = [1, 1]} : vector<11x128xf32> to vector<1x32xf32>
    %3 = vector.shape_cast %2 : vector<1x32xf32> to vector<32xf32>
    %4 = vector.extract_strided_slice %1 {offsets = [1, 0], sizes = [1, 32], strides = [1, 1]} : vector<11x128xf32> to vector<1x32xf32>
    %5 = vector.shape_cast %4 : vector<1x32xf32> to vector<32xf32>
    %6 = vector.extract_strided_slice %1 {offsets = [2, 0], sizes = [1, 32], strides = [1, 1]} : vector<11x128xf32> to vector<1x32xf32>
    %7 = vector.shape_cast %6 : vector<1x32xf32> to vector<32xf32>
    %8 = vector.extract_strided_slice %1 {offsets = [3, 0], sizes = [1, 32], strides = [1, 1]} : vector<11x128xf32> to vector<1x32xf32>
    %9 = vector.shape_cast %8 : vector<1x32xf32> to vector<32xf32>
    %10 = vector.extract_strided_slice %1 {offsets = [4, 0], sizes = [1, 32], strides = [1, 1]} : vector<11x128xf32> to vector<1x32xf32>
    %11 = vector.shape_cast %10 : vector<1x32xf32> to vector<32xf32>
    %12 = vector.extract_strided_slice %1 {offsets = [5, 0], sizes = [1, 32], strides = [1, 1]} : vector<11x128xf32> to vector<1x32xf32>
    %13 = vector.shape_cast %12 : vector<1x32xf32> to vector<32xf32>
    %14 = vector.extract_strided_slice %1 {offsets = [6, 0], sizes = [1, 32], strides = [1, 1]} : vector<11x128xf32> to vector<1x32xf32>
    %15 = vector.shape_cast %14 : vector<1x32xf32> to vector<32xf32>
    %16 = vector.extract_strided_slice %1 {offsets = [7, 0], sizes = [1, 32], strides = [1, 1]} : vector<11x128xf32> to vector<1x32xf32>
    %17 = vector.shape_cast %16 : vector<1x32xf32> to vector<32xf32>
    %18 = vector.extract_strided_slice %1 {offsets = [8, 0], sizes = [1, 32], strides = [1, 1]} : vector<11x128xf32> to vector<1x32xf32>
    %19 = vector.shape_cast %18 : vector<1x32xf32> to vector<32xf32>
    %20 = vector.extract_strided_slice %1 {offsets = [9, 0], sizes = [1, 32], strides = [1, 1]} : vector<11x128xf32> to vector<1x32xf32>
    %21 = vector.shape_cast %20 : vector<1x32xf32> to vector<32xf32>
    %22 = vector.extract_strided_slice %1 {offsets = [10, 0], sizes = [1, 128], strides = [1, 1]} : vector<11x128xf32> to vector<1x128xf32>
    %23 = vector.shape_cast %22 : vector<1x128xf32> to vector<128xf32>
    %cst = arith.constant dense<0.000000e+00> : vector<16xf32>
    %24 = vector.multi_reduction <add>, %0, %cst [1] : vector<16x32xf32> to vector<16xf32>
    %25 = vector.shape_cast %24 : vector<16xf32> to vector<16x1xf32>
    %26 = arith.mulf %0, %0 : vector<16x32xf32>
    %cst_2 = arith.constant dense<0.000000e+00> : vector<16xf32>
    %27 = vector.multi_reduction <add>, %26, %cst_2 [1] : vector<16x32xf32> to vector<16xf32>
    %28 = vector.shape_cast %27 : vector<16xf32> to vector<16x1xf32>
    %cst_3 = arith.constant 3.125000e-02 : f32
    %29 = vector.broadcast %cst_3 : f32 to vector<16x1xf32>
    %30 = arith.mulf %25, %29 : vector<16x1xf32>
    %cst_4 = arith.constant 3.125000e-02 : f32
    %31 = vector.broadcast %cst_4 : f32 to vector<16x1xf32>
    %32 = arith.mulf %28, %31 : vector<16x1xf32>
    %33 = arith.mulf %30, %30 : vector<16x1xf32>
    %34 = arith.subf %32, %33 : vector<16x1xf32>
    %35 = vector.broadcast %30 : vector<16x1xf32> to vector<16x32xf32>
    %36 = arith.subf %0, %35 : vector<16x32xf32>
    %cst_5 = arith.constant 9.99999974E-6 : f32
    %37 = vector.broadcast %cst_5 : f32 to vector<16x1xf32>
    %38 = arith.addf %34, %37 : vector<16x1xf32>
    %39 = math.rsqrt %38 : vector<16x1xf32>
    %40 = vector.broadcast %39 : vector<16x1xf32> to vector<16x32xf32>
    %41 = arith.mulf %36, %40 : vector<16x32xf32>
    %42 = vector.shape_cast %3 : vector<32xf32> to vector<1x32xf32>
    %43 = vector.broadcast %42 : vector<1x32xf32> to vector<16x32xf32>
    %44 = arith.mulf %41, %43 : vector<16x32xf32>
    %45 = vector.shape_cast %5 : vector<32xf32> to vector<1x32xf32>
    %46 = vector.broadcast %45 : vector<1x32xf32> to vector<16x32xf32>
    %47 = arith.addf %44, %46 : vector<16x32xf32>
    %c0_6 = arith.constant 0 : index
    %c0_7 = arith.constant 0 : index
    %48 = vector.load %arg1[%c0_6, %c0_7] : memref<224x128xf32, #tpu.memory_space<vmem>>, vector<32x128xf32>
    %cst_8 = arith.constant dense<0.000000e+00> : vector<16x128xf32>
    %49 = tpu.matmul %47, %48, %cst_8 {dimension_numbers = #tpu.dot_dimension_numbers<[1], [0], [0], [1], [0, 0, 1, 1], [], []>} : vector<16x32xf32>, vector<32x128xf32>, vector<16x128xf32> -> vector<16x128xf32>
    %50 = vector.extract_strided_slice %49 {offsets = [0, 0], sizes = [16, 32], strides = [1, 1]} : vector<16x128xf32> to vector<16x32xf32>
    %51 = vector.extract_strided_slice %49 {offsets = [0, 32], sizes = [16, 32], strides = [1, 1]} : vector<16x128xf32> to vector<16x32xf32>
    %52 = vector.extract_strided_slice %49 {offsets = [0, 64], sizes = [16, 32], strides = [1, 1]} : vector<16x128xf32> to vector<16x32xf32>
    %c96 = arith.constant 96 : index
    %c0_9 = arith.constant 0 : index
    %53 = vector.load %arg1[%c96, %c0_9] : memref<224x128xf32, #tpu.memory_space<vmem>>, vector<32x32xf32>
    %54 = arith.mulf %50, %50 : vector<16x32xf32>
    %55 = arith.mulf %51, %51 : vector<16x32xf32>
    %56 = tpu.concatenate %50, %51, %54, %55 in 0 : vector<16x32xf32>, vector<16x32xf32>, vector<16x32xf32>, vector<16x32xf32> -> vector<64x32xf32>
    %cst_10 = arith.constant dense<0.000000e+00> : vector<64x32xf32>
    %57 = tpu.matmul %56, %53, %cst_10 {dimension_numbers = #tpu.dot_dimension_numbers<[1], [0], [0], [1], [0, 0, 1, 1], [], []>} : vector<64x32xf32>, vector<32x32xf32>, vector<64x32xf32> -> vector<64x32xf32>
    %58 = vector.extract_strided_slice %57 {offsets = [0, 0], sizes = [16, 32], strides = [1, 1]} : vector<64x32xf32> to vector<16x32xf32>
    %59 = vector.extract_strided_slice %57 {offsets = [16, 0], sizes = [16, 32], strides = [1, 1]} : vector<64x32xf32> to vector<16x32xf32>
    %60 = vector.extract_strided_slice %57 {offsets = [32, 0], sizes = [16, 32], strides = [1, 1]} : vector<64x32xf32> to vector<16x32xf32>
    %61 = vector.extract_strided_slice %57 {offsets = [48, 0], sizes = [16, 32], strides = [1, 1]} : vector<64x32xf32> to vector<16x32xf32>
    %62 = arith.subf %50, %58 : vector<16x32xf32>
    %63 = arith.mulf %58, %58 : vector<16x32xf32>
    %64 = arith.subf %60, %63 : vector<16x32xf32>
    %cst_11 = arith.constant 9.99999974E-6 : f32
    %65 = vector.broadcast %cst_11 : f32 to vector<16x32xf32>
    %66 = arith.addf %64, %65 : vector<16x32xf32>
    %67 = math.rsqrt %66 : vector<16x32xf32>
    %68 = arith.mulf %62, %67 : vector<16x32xf32>
    %69 = vector.shape_cast %7 : vector<32xf32> to vector<1x32xf32>
    %70 = vector.broadcast %69 : vector<1x32xf32> to vector<16x32xf32>
    %71 = arith.mulf %68, %70 : vector<16x32xf32>
    %72 = vector.shape_cast %9 : vector<32xf32> to vector<1x32xf32>
    %73 = vector.broadcast %72 : vector<1x32xf32> to vector<16x32xf32>
    %74 = arith.addf %71, %73 : vector<16x32xf32>
    %75 = arith.subf %51, %59 : vector<16x32xf32>
    %76 = arith.mulf %59, %59 : vector<16x32xf32>
    %77 = arith.subf %61, %76 : vector<16x32xf32>
    %cst_12 = arith.constant 9.99999974E-6 : f32
    %78 = vector.broadcast %cst_12 : f32 to vector<16x32xf32>
    %79 = arith.addf %77, %78 : vector<16x32xf32>
    %80 = math.rsqrt %79 : vector<16x32xf32>
    %81 = arith.mulf %75, %80 : vector<16x32xf32>
    %82 = vector.shape_cast %11 : vector<32xf32> to vector<1x32xf32>
    %83 = vector.broadcast %82 : vector<1x32xf32> to vector<16x32xf32>
    %84 = arith.mulf %81, %83 : vector<16x32xf32>
    %85 = vector.shape_cast %13 : vector<32xf32> to vector<1x32xf32>
    %86 = vector.broadcast %85 : vector<1x32xf32> to vector<16x32xf32>
    %87 = arith.addf %84, %86 : vector<16x32xf32>
    %c128 = arith.constant 128 : index
    %c0_13 = arith.constant 0 : index
    %88 = vector.load %arg1[%c128, %c0_13] : memref<224x128xf32, #tpu.memory_space<vmem>>, vector<64x32xf32>
    %c192 = arith.constant 192 : index
    %c0_14 = arith.constant 0 : index
    %89 = vector.load %arg1[%c192, %c0_14] : memref<224x128xf32, #tpu.memory_space<vmem>>, vector<16x64xf32>
    %90 = tpu.concatenate %87, %87, %87, %87 in 0 : vector<16x32xf32>, vector<16x32xf32>, vector<16x32xf32>, vector<16x32xf32> -> vector<64x32xf32>
    %91 = arith.mulf %90, %88 : vector<64x32xf32>
    %92 = tpu.concatenate %52, %52, %52, %52 in 0 : vector<16x32xf32>, vector<16x32xf32>, vector<16x32xf32>, vector<16x32xf32> -> vector<64x32xf32>
    %93 = arith.mulf %92, %88 : vector<64x32xf32>
    %cst_15 = arith.constant dense<0.000000e+00> : vector<16x64xf32>
    %94 = tpu.matmul %74, %91, %cst_15 {dimension_numbers = #tpu.dot_dimension_numbers<[1], [1], [0], [0], [0, 0, 1, 0], [], []>} : vector<16x32xf32>, vector<64x32xf32>, vector<16x64xf32> -> vector<16x64xf32>
    %95 = arith.addf %94, %89 : vector<16x64xf32>
    %cst_16 = arith.constant dense<0xFF800000> : vector<16xf32>
    %96 = vector.multi_reduction <maximumf>, %95, %cst_16 [1] : vector<16x64xf32> to vector<16xf32>
    %97 = vector.shape_cast %96 : vector<16xf32> to vector<16x1xf32>
    %98 = vector.broadcast %97 : vector<16x1xf32> to vector<16x64xf32>
    %99 = arith.subf %95, %98 : vector<16x64xf32>
    %100 = math.exp %99 : vector<16x64xf32>
    %101 = tpu.concatenate %88, %93 in 1 : vector<64x32xf32>, vector<64x32xf32> -> vector<64x64xf32>
    %cst_17 = arith.constant dense<0.000000e+00> : vector<16x64xf32>
    %102 = tpu.matmul %100, %101, %cst_17 {dimension_numbers = #tpu.dot_dimension_numbers<[1], [0], [0], [1], [0, 0, 1, 1], [], []>} : vector<16x64xf32>, vector<64x64xf32>, vector<16x64xf32> -> vector<16x64xf32>
    %103 = vector.extract_strided_slice %102 {offsets = [0, 0], sizes = [16, 32], strides = [1, 1]} : vector<16x64xf32> to vector<16x32xf32>
    %104 = vector.extract_strided_slice %102 {offsets = [0, 32], sizes = [16, 32], strides = [1, 1]} : vector<16x64xf32> to vector<16x32xf32>
    %105 = arith.divf %104, %103 : vector<16x32xf32>
    %106 = vector.extract_strided_slice %48 {offsets = [0, 96], sizes = [32, 32], strides = [1, 1]} : vector<32x128xf32> to vector<32x32xf32>
    %cst_18 = arith.constant dense<0.000000e+00> : vector<16x32xf32>
    %107 = tpu.matmul %105, %106, %cst_18 {dimension_numbers = #tpu.dot_dimension_numbers<[1], [0], [0], [1], [0, 0, 1, 1], [], []>} : vector<16x32xf32>, vector<32x32xf32>, vector<16x32xf32> -> vector<16x32xf32>
    %108 = arith.addf %0, %107 : vector<16x32xf32>
    %109 = vector.shape_cast %15 : vector<32xf32> to vector<1x32xf32>
    %110 = vector.broadcast %109 : vector<1x32xf32> to vector<16x32xf32>
    %111 = arith.addf %108, %110 : vector<16x32xf32>
    %cst_19 = arith.constant dense<0.000000e+00> : vector<16xf32>
    %112 = vector.multi_reduction <add>, %111, %cst_19 [1] : vector<16x32xf32> to vector<16xf32>
    %113 = vector.shape_cast %112 : vector<16xf32> to vector<16x1xf32>
    %114 = arith.mulf %111, %111 : vector<16x32xf32>
    %cst_20 = arith.constant dense<0.000000e+00> : vector<16xf32>
    %115 = vector.multi_reduction <add>, %114, %cst_20 [1] : vector<16x32xf32> to vector<16xf32>
    %116 = vector.shape_cast %115 : vector<16xf32> to vector<16x1xf32>
    %cst_21 = arith.constant 3.125000e-02 : f32
    %117 = vector.broadcast %cst_21 : f32 to vector<16x1xf32>
    %118 = arith.mulf %113, %117 : vector<16x1xf32>
    %cst_22 = arith.constant 3.125000e-02 : f32
    %119 = vector.broadcast %cst_22 : f32 to vector<16x1xf32>
    %120 = arith.mulf %116, %119 : vector<16x1xf32>
    %121 = arith.mulf %118, %118 : vector<16x1xf32>
    %122 = arith.subf %120, %121 : vector<16x1xf32>
    %123 = vector.broadcast %118 : vector<16x1xf32> to vector<16x32xf32>
    %124 = arith.subf %111, %123 : vector<16x32xf32>
    %cst_23 = arith.constant 9.99999974E-6 : f32
    %125 = vector.broadcast %cst_23 : f32 to vector<16x1xf32>
    %126 = arith.addf %122, %125 : vector<16x1xf32>
    %127 = math.rsqrt %126 : vector<16x1xf32>
    %128 = vector.broadcast %127 : vector<16x1xf32> to vector<16x32xf32>
    %129 = arith.mulf %124, %128 : vector<16x32xf32>
    %130 = vector.shape_cast %17 : vector<32xf32> to vector<1x32xf32>
    %131 = vector.broadcast %130 : vector<1x32xf32> to vector<16x32xf32>
    %132 = arith.mulf %129, %131 : vector<16x32xf32>
    %133 = vector.shape_cast %19 : vector<32xf32> to vector<1x32xf32>
    %134 = vector.broadcast %133 : vector<1x32xf32> to vector<16x32xf32>
    %135 = arith.addf %132, %134 : vector<16x32xf32>
    %c32 = arith.constant 32 : index
    %c0_24 = arith.constant 0 : index
    %136 = vector.load %arg1[%c32, %c0_24] : memref<224x128xf32, #tpu.memory_space<vmem>>, vector<32x128xf32>
    %cst_25 = arith.constant dense<0.000000e+00> : vector<16x128xf32>
    %137 = tpu.matmul %135, %136, %cst_25 {dimension_numbers = #tpu.dot_dimension_numbers<[1], [0], [0], [1], [0, 0, 1, 1], [], []>} : vector<16x32xf32>, vector<32x128xf32>, vector<16x128xf32> -> vector<16x128xf32>
    %138 = vector.shape_cast %23 : vector<128xf32> to vector<1x128xf32>
    %139 = vector.broadcast %138 : vector<1x128xf32> to vector<16x128xf32>
    %140 = arith.addf %137, %139 : vector<16x128xf32>
    %cst_26 = arith.constant 5.000000e-01 : f32
    %141 = vector.broadcast %cst_26 : f32 to vector<16x128xf32>
    %142 = arith.mulf %141, %140 : vector<16x128xf32>
    %cst_27 = arith.constant 0.707106769 : f32
    %143 = vector.broadcast %cst_27 : f32 to vector<16x128xf32>
    %144 = arith.mulf %140, %143 : vector<16x128xf32>
    %145 = math.erf %144 : vector<16x128xf32>
    %cst_28 = arith.constant 1.000000e+00 : f32
    %146 = vector.broadcast %cst_28 : f32 to vector<16x128xf32>
    %147 = arith.addf %146, %145 : vector<16x128xf32>
    %148 = arith.mulf %142, %147 : vector<16x128xf32>
    %c64 = arith.constant 64 : index
    %c0_29 = arith.constant 0 : index
    %149 = vector.load %arg1[%c64, %c0_29] : memref<224x128xf32, #tpu.memory_space<vmem>>, vector<32x128xf32>
    %cst_30 = arith.constant dense<0.000000e+00> : vector<16x32xf32>
    %150 = tpu.matmul %148, %149, %cst_30 {dimension_numbers = #tpu.dot_dimension_numbers<[1], [1], [0], [0], [0, 0, 1, 0], [], []>} : vector<16x128xf32>, vector<32x128xf32>, vector<16x32xf32> -> vector<16x32xf32>
    %151 = vector.shape_cast %21 : vector<32xf32> to vector<1x32xf32>
    %152 = vector.broadcast %151 : vector<1x32xf32> to vector<16x32xf32>
    %153 = arith.addf %150, %152 : vector<16x32xf32>
    %154 = arith.addf %111, %153 : vector<16x32xf32>
    %c0_31 = arith.constant 0 : index
    %c0_32 = arith.constant 0 : index
    %155 = vector.load %arg2[%c0_31, %c0_32] : memref<16x32xf32, #tpu.memory_space<vmem>>, vector<16x32xf32>
    tpu.vector_store %arg2[%c0_31, %c0_32], %154 {strides = array<i32>} : memref<16x32xf32, #tpu.memory_space<vmem>>, vector<16x32xf32>,
    return
  }
}

</mosaic_0001>

<llo_original>
// kernel: tpu_custom_call.1
$region0: #{tpu_custom_call.1}
  #allocation0 [shape = 'u32[]', space=smem, size = 0x4, offset = 0x4, fixed_abs, tag = 'smem constant byte address 0x4 - core index']
  #allocation1 [shape = 'u32[144,128]{1,0:T(1,128)}', space=vmem, size = 0x12000, scoped, tag = 'internal scratch']
  %s0 = inlined_call_operand.hbm [shape: f32[16,32], index: 0, kind: input, shape index: {}]
  %s1 = inlined_call_operand.hbm [shape: f32[224,128], index: 1, kind: input, shape index: {}]
  %s2 = inlined_call_operand.hbm [shape: f32[16,32], index: 2, kind: output, shape index: {}]
  %s3 = sld [smem:[#allocation0]]
  $region26: #{tpu_custom_call.1} parent=0
    _
  %s5 = ssub.s32 1, %s3
  %s6 = scalar_select 0, %s5, %s3
  $region1: #{tpu_custom_call.1} parent=0
    #allocation2 [shape = 'u8[8192]{0}', space=vmem, size = 0x2000, scoped, tag = 'input window, operand 0, single buffered']
    #allocation3 [shape = 's32[1]{0}', space=sflag, size = 0x4, scoped, tag = 'scoped memory for tpu_custom_call.1']
    #allocation4 [shape = 's32[1]{0}', space=sflag, size = 0x4, scoped, tag = 'scoped memory for tpu_custom_call.1']
    #allocation5 [shape = 'u8[114688]{0}', space=vmem, size = 0x1c000, scoped, tag = 'input window, operand 1, single buffered']
    #allocation6 [shape = 's32[1]{0}', space=sflag, size = 0x4, scoped, tag = 'scoped memory for tpu_custom_call.1']
    #allocation7 [shape = 'u8[8192]{0}', space=vmem, size = 0x2000, scoped, tag = 'output window, operand 0, single buffered']
    %7 = vsyncpa [#allocation3], 0
    %8 = vsyncpa [#allocation6], 0
    %9 = vsyncpa [#allocation4], 0
    // Predicated region
    $region2: #{tpu_custom_call.1} parent=1 // pred_check
      _
    $region3: #{tpu_custom_call.1} parent=1 // pred_check_branch
      %11 = sbr.rel (0) target = $region5
    $region4: #{tpu_custom_call.1} parent=1 // pred_region
      %s13 = ssub.s32 256, 256
      %14 = vsyncadd [#allocation3], %s13
      %s15 = sshll.u32 [#allocation2], 4
      %s16 = int_to_ptr.vmem [resolvable:$true] %s15
      %21 = dma.hbm_to_vmem [thread:$0]  %s0, 256, %s16, [#allocation3], 128, 128, 8
    $region5: #{tpu_custom_call.1} parent=1 // pred_fallthru
      _
    // Predicated region
    $region6: #{tpu_custom_call.1} parent=1 // pred_check
      _
    $region7: #{tpu_custom_call.1} parent=1 // pred_check_branch
      %23 = sbr.rel (0) target = $region9
    $region8: #{tpu_custom_call.1} parent=1 // pred_region
      %s25 = ssub.s32 3584, 3584
      %26 = vsyncadd [#allocation6], %s25
      %s27 = sshll.u32 [#allocation5], 4
      %s28 = int_to_ptr.vmem [resolvable:$true] %s27
      %33 = dma.hbm_to_vmem [thread:$0]  %s1, 3584, %s28, [#allocation6], 128, 128, 8
    $region9: #{tpu_custom_call.1} parent=1 // pred_fallthru
      _
    // Predicated region
    $region10: #{tpu_custom_call.1} parent=1 // pred_check
      _
    $region11: #{tpu_custom_call.1} parent=1 // pred_check_branch
      %35 = sbr.rel (0) target = $region13
    $region12: #{tpu_custom_call.1} parent=1 // pred_region
      %36 = dma.done [#allocation3], 256
    $region13: #{tpu_custom_call.1} parent=1 // pred_fallthru
      _
    // Predicated region
    $region14: #{tpu_custom_call.1} parent=1 // pred_check
      _
    $region15: #{tpu_custom_call.1} parent=1 // pred_check_branch
      %38 = sbr.rel (0) target = $region17
    $region16: #{tpu_custom_call.1} parent=1 // pred_region
      %39 = dma.done [#allocation6], 3584
    $region17: #{tpu_custom_call.1} parent=1 // pred_fallthru
      _
    %v40 = vld [vmem:[#allocation2] sm:$0xff]
    %v41 = vld [vmem:[#allocation2 + $0x8] sm:$0xff]
    %v42 = vld [vmem:[#allocation5 + $0xd0] sm:$0xff]
    %v43 = vld [vmem:[#allocation5 + $0xd8] sm:$0x7]
    %vm44 = vcmask 261120
    %v45 = vsel %vm44, %v40, 0.0
    %46 = vadd.xlane.f32.xlu0 %v45
    %v47 = vpop.xlane.xlu0 %46
    %v48 = vsel %vm44, %v41, 0.0
    %49 = vadd.xlane.f32.xlu0 %v48
    %v50 = vpop.xlane.xlu0 %49
    %v51 = vmul.f32 %v40, %v40
    %v52 = vmul.f32 %v41, %v41
    %v53 = vsel %vm44, %v51, 0.0
    %54 = vadd.xlane.f32.xlu0 %v53
    %v55 = vpop.xlane.xlu0 %54
    %v56 = vsel %vm44, %v52, 0.0
    %57 = vadd.xlane.f32.xlu0 %v56
    %v58 = vpop.xlane.xlu0 %57
    %v59 = vmul.f32 %v47, 0.03125
    %v60 = vmul.f32 %v50, 0.03125
    %v61 = vmul.f32 %v55, 0.03125
    %v62 = vmul.f32 %v58, 0.03125
    %v63 = vmul.f32 %v59, %v59
    %v64 = vmul.f32 %v60, %v60
    %v65 = vsub.f32 %v61, %v63
    %v66 = vsub.f32 %v62, %v64
    %v67 = vsub.f32 %v40, %v59
    %v68 = vsub.f32 %v41, %v60
    %v69 = vadd.f32 %v65, 1e-05
    %v70 = vadd.f32 %v66, 1e-05
    %v71 = vrsqrt.pop %v69
    %v72 = vrsqrt.pop %v70
    %v73 = vmul.f32 %v67, %v71
    %v74 = vmul.f32 %v68, %v72
    %v75 = vlaneseq
    %v76 = vshrl.u32 %v75, 7
    %v77 = vsub.s32 0, %v76
    %v78 = vrot.slane %v42, %v77
    %v79 = vmul.f32 %v73, %v78
    %v80 = vmul.f32 %v74, %v78
    %v81 = vlaneseq
    %v82 = vshrl.u32 %v81, 7
    %v83 = vsub.s32 1, %v82
    %v84 = vrot.slane %v42, %v83
    %v85 = vadd.f32 %v79, %v84
    %v86 = vadd.f32 %v80, %v84
    %v87 = vld [vmem:[#allocation5] sm:$0xff]
    %v88 = vld [vmem:[#allocation5 + $0x8] sm:$0xff]
    %v89 = vld [vmem:[#allocation5 + $0x10] sm:$0xff]
    %v90 = vld [vmem:[#allocation5 + $0x18] sm:$0xff]
    %v92 = vsel %vm44, %v85, 0
    %v95 = vsel %vm44, %v86, 0
    %97 = vmatprep.subr.mxu0 0.0
    %98 = vmatpush1.msra.mxu0 %v87
    %99 = vmatprep.subr.mxu0 0.0
    %100 = vmatpush1.msra.mxu0 %v88
    %101 = vmatprep.subr.mxu0 0.0
    %102 = vmatpush1.msra.mxu0 %v89
    %103 = vmatprep.subr.mxu0 0.0
    %104 = vmatpush1.msra.mxu0 %v90
    %105 = vmatprep.subr.mxu0 0.0
    %106 = vmatpush1.msra.mxu0 0.0
    %107 = vmatprep.subr.mxu0 0.0
    %108 = vmatpush1.msra.mxu0 0.0
    %109 = vmatprep.subr.mxu0 0.0
    %110 = vmatpush1.msra.mxu0 0.0
    %111 = vmatprep.subr.mxu0 0.0
    %112 = vmatpush1.msra.mxu0 0.0
    %113 = vmatprep.subr.mxu0 0.0
    %114 = vmatpush1.msra.mxu0 0.0
    %115 = vmatprep.subr.mxu0 0.0
    %116 = vmatpush1.msra.mxu0 0.0
    %117 = vmatprep.subr.mxu0 0.0
    %118 = vmatpush1.msra.mxu0 0.0
    %119 = vmatprep.subr.mxu0 0.0
    %120 = vmatpush1.msra.mxu0 0.0
    %121 = vmatprep.subr.mxu0 0.0
    %122 = vmatpush1.msra.mxu0 0.0
    %123 = vmatprep.subr.mxu0 0.0
    %124 = vmatpush1.msra.mxu0 0.0
    %125 = vmatprep.subr.mxu0 0.0
    %126 = vmatpush1.msra.mxu0 0.0
    %127 = vmatprep.subr.mxu0 0.0
    %128 = vmatpush1.msra.mxu0 0.0
    %129 = vmatprep.subr.mxu0 0.0
    %130 = vmatpush1.msra.mxu0 0.0
    %131 = vmatprep.subr.mxu0 0.0
    %132 = vmatpush1.msra.mxu0 0.0
    %133 = vmatprep.subr.mxu0 0.0
    %134 = vmatpush1.msra.mxu0 0.0
    %135 = vmatprep.subr.mxu0 0.0
    %136 = vmatpush1.msra.mxu0 0.0
    %137 = vmatprep.subr.mxu0 0.0
    %138 = vmatpush1.msra.mxu0 0.0
    %139 = vmatprep.subr.mxu0 0.0
    %140 = vmatpush1.msra.mxu0 0.0
    %141 = vmatprep.subr.mxu0 0.0
    %142 = vmatpush1.msra.mxu0 0.0
    %143 = vmatprep.subr.mxu0 0.0
    %144 = vmatpush1.msra.mxu0 0.0
    %145 = vmatprep.subr.mxu0 0.0
    %146 = vmatpush1.msra.mxu0 0.0
    %147 = vmatprep.subr.mxu0 0.0
    %148 = vmatpush1.msra.mxu0 0.0
    %149 = vmatprep.subr.mxu0 0.0
    %150 = vmatpush1.msra.mxu0 0.0
    %151 = vmatprep.subr.mxu0 0.0
    %152 = vmatpush1.msra.mxu0 0.0
    %153 = vmatprep.subr.mxu0 0.0
    %154 = vmatpush1.msra.mxu0 0.0
    %155 = vmatprep.subr.mxu0 0.0
    %156 = vmatpush1.msra.mxu0 0.0
    %157 = vmatprep.subr.mxu0 0.0
    %158 = vmatpush1.msra.mxu0 0.0
    %159 = vmatprep.subr.mxu0 0.0
    %160 = vmatpush1.msra.mxu0 0.0
    %161 = vmatprep.mubr.f32.mxu0 0.0
    %162 = vmatmul.mubr.f32.gmra.mrb[0].mxu0 %v92
    %v163 = vpop.f32.mrb[0].mxu0
    %v164 = vadd.f32 0.0, %v163
    %v165 = vpop.f32.mrb[0].mxu0
    %166 = vmatprep.mubr.f32.mxu0 0.0
    %167 = vmatmul.mubr.f32.gmra.mrb[0].mxu0 %v95
    %v168 = vpop.f32.mrb[0].mxu0
    %v169 = vadd.f32 0.0, %v168
    %v170 = vpop.f32.mrb[0].mxu0
    %171 = vdwg.mxu0
    %v172 = vld [vmem:[#allocation5 + $0x60] sm:$0xff]
    %v173 = vld [vmem:[#allocation5 + $0x68] sm:$0xff]
    %v174 = vld [vmem:[#allocation5 + $0x70] sm:$0xff]
    %v175 = vld [vmem:[#allocation5 + $0x78] sm:$0xff]
    %v176 = vmul.f32 %v164, %v164
    %v177 = vmul.f32 %v169, %v169
    %180 = vrot.lane.b32.xlu0 %v164, 96
    %v181 = vpop.permute.xlu0 %180
    %182 = vrot.lane.b32.xlu0 %v169, 96
    %v183 = vpop.permute.xlu0 %182
    %186 = vrot.lane.b32.xlu0 %v176, 96
    %v187 = vpop.permute.xlu0 %186
    %188 = vrot.lane.b32.xlu0 %v177, 96
    %v189 = vpop.permute.xlu0 %188
    %v190 = vsel %vm44, %v164, 0
    %v192 = vsel %vm44, %v169, 0
    %v194 = vsel %vm44, %v181, 0
    %v196 = vsel %vm44, %v183, 0
    %v198 = vsel %vm44, %v176, 0
    %v200 = vsel %vm44, %v177, 0
    %v202 = vsel %vm44, %v187, 0
    %v204 = vsel %vm44, %v189, 0
    %206 = vmatprep.subr.mxu0 0.0
    %207 = vmatpush1.msra.mxu0 %v172
    %208 = vmatprep.subr.mxu0 0.0
    %209 = vmatpush1.msra.mxu0 %v173
    %210 = vmatprep.subr.mxu0 0.0
    %211 = vmatpush1.msra.mxu0 %v174
    %212 = vmatprep.subr.mxu0 0.0
    %213 = vmatpush1.msra.mxu0 %v175
    %214 = vmatprep.subr.mxu0 0.0
    %215 = vmatpush1.msra.mxu0 0.0
    %216 = vmatprep.subr.mxu0 0.0
    %217 = vmatpush1.msra.mxu0 0.0
    %218 = vmatprep.subr.mxu0 0.0
    %219 = vmatpush1.msra.mxu0 0.0
    %220 = vmatprep.subr.mxu0 0.0
    %221 = vmatpush1.msra.mxu0 0.0
    %222 = vmatprep.subr.mxu0 0.0
    %223 = vmatpush1.msra.mxu0 0.0
    %224 = vmatprep.subr.mxu0 0.0
    %225 = vmatpush1.msra.mxu0 0.0
    %226 = vmatprep.subr.mxu0 0.0
    %227 = vmatpush1.msra.mxu0 0.0
    %228 = vmatprep.subr.mxu0 0.0
    %229 = vmatpush1.msra.mxu0 0.0
    %230 = vmatprep.subr.mxu0 0.0
    %231 = vmatpush1.msra.mxu0 0.0
    %232 = vmatprep.subr.mxu0 0.0
    %233 = vmatpush1.msra.mxu0 0.0
    %234 = vmatprep.subr.mxu0 0.0
    %235 = vmatpush1.msra.mxu0 0.0
    %236 = vmatprep.subr.mxu0 0.0
    %237 = vmatpush1.msra.mxu0 0.0
    %238 = vmatprep.subr.mxu0 0.0
    %239 = vmatpush1.msra.mxu0 0.0
    %240 = vmatprep.subr.mxu0 0.0
    %241 = vmatpush1.msra.mxu0 0.0
    %242 = vmatprep.subr.mxu0 0.0
    %243 = vmatpush1.msra.mxu0 0.0
    %244 = vmatprep.subr.mxu0 0.0
    %245 = vmatpush1.msra.mxu0 0.0
    %246 = vmatprep.subr.mxu0 0.0
    %247 = vmatpush1.msra.mxu0 0.0
    %248 = vmatprep.subr.mxu0 0.0
    %249 = vmatpush1.msra.mxu0 0.0
    %250 = vmatprep.subr.mxu0 0.0
    %251 = vmatpush1.msra.mxu0 0.0
    %252 = vmatprep.subr.mxu0 0.0
    %253 = vmatpush1.msra.mxu0 0.0
    %254 = vmatprep.subr.mxu0 0.0
    %255 = vmatpush1.msra.mxu0 0.0
    %256 = vmatprep.subr.mxu0 0.0
    %257 = vmatpush1.msra.mxu0 0.0
    %258 = vmatprep.subr.mxu0 0.0
    %259 = vmatpush1.msra.mxu0 0.0
    %260 = vmatprep.subr.mxu0 0.0
    %261 = vmatpush1.msra.mxu0 0.0
    %262 = vmatprep.subr.mxu0 0.0
    %263 = vmatpush1.msra.mxu0 0.0
    %264 = vmatprep.subr.mxu0 0.0
    %265 = vmatpush1.msra.mxu0 0.0
    %266 = vmatprep.subr.mxu0 0.0
    %267 = vmatpush1.msra.mxu0 0.0
    %268 = vmatprep.subr.mxu0 0.0
    %269 = vmatpush1.msra.mxu0 0.0
    %270 = vmatprep.mubr.f32.mxu0 0.0
    %271 = vmatmul.mubr.f32.gmra.mrb[0].mxu0 %v190
    %v272 = vpop.f32.mrb[0].mxu0
    %v273 = vadd.f32 0.0, %v272
    %v274 = vpop.f32.mrb[0].mxu0
    %275 = vmatprep.mubr.f32.mxu0 0.0
    %276 = vmatmul.mubr.f32.gmra.mrb[0].mxu0 %v192
    %v277 = vpop.f32.mrb[0].mxu0
    %v278 = vadd.f32 0.0, %v277
    %v279 = vpop.f32.mrb[0].mxu0
    %280 = vmatprep.mubr.f32.mxu0 0.0
    %281 = vmatmul.mubr.f32.gmra.mrb[0].mxu0 %v194
    %v282 = vpop.f32.mrb[0].mxu0
    %v283 = vadd.f32 0.0, %v282
    %v284 = vpop.f32.mrb[0].mxu0
    %285 = vmatprep.mubr.f32.mxu0 0.0
    %286 = vmatmul.mubr.f32.gmra.mrb[0].mxu0 %v196
    %v287 = vpop.f32.mrb[0].mxu0
    %v288 = vadd.f32 0.0, %v287
    %v289 = vpop.f32.mrb[0].mxu0
    %290 = vmatprep.mubr.f32.mxu0 0.0
    %291 = vmatmul.mubr.f32.gmra.mrb[0].mxu0 %v198
    %v292 = vpop.f32.mrb[0].mxu0
    %v293 = vadd.f32 0.0, %v292
    %v294 = vpop.f32.mrb[0].mxu0
    %295 = vmatprep.mubr.f32.mxu0 0.0
    %296 = vmatmul.mubr.f32.gmra.mrb[0].mxu0 %v200
    %v297 = vpop.f32.mrb[0].mxu0
    %v298 = vadd.f32 0.0, %v297
    %v299 = vpop.f32.mrb[0].mxu0
    %300 = vmatprep.mubr.f32.mxu0 0.0
    %301 = vmatmul.mubr.f32.gmra.mrb[0].mxu0 %v202
    %v302 = vpop.f32.mrb[0].mxu0
    %v303 = vadd.f32 0.0, %v302
    %v304 = vpop.f32.mrb[0].mxu0
    %305 = vmatprep.mubr.f32.mxu0 0.0
    %306 = vmatmul.mubr.f32.gmra.mrb[0].mxu0 %v204
    %v307 = vpop.f32.mrb[0].mxu0
    %v308 = vadd.f32 0.0, %v307
    %v309 = vpop.f32.mrb[0].mxu0
    %310 = vdwg.mxu0
    %v311 = vsub.f32 %v164, %v273
    %v312 = vsub.f32 %v169, %v278
    %v313 = vmul.f32 %v273, %v273
    %v314 = vmul.f32 %v278, %v278
    %v315 = vsub.f32 %v293, %v313
    %v316 = vsub.f32 %v298, %v314
    %v317 = vadd.f32 %v315, 1e-05
    %v318 = vadd.f32 %v316, 1e-05
    %v319 = vrsqrt.pop %v317
    %v320 = vrsqrt.pop %v318
    %v321 = vmul.f32 %v311, %v319
    %v322 = vmul.f32 %v312, %v320
    %v323 = vlaneseq
    %v324 = vshrl.u32 %v323, 7
    %v325 = vsub.s32 2, %v324
    %v326 = vrot.slane %v42, %v325
    %v327 = vmul.f32 %v321, %v326
    %v328 = vmul.f32 %v322, %v326
    %v329 = vlaneseq
    %v330 = vshrl.u32 %v329, 7
    %v331 = vsub.s32 3, %v330
    %v332 = vrot.slane %v42, %v331
    %v333 = vadd.f32 %v327, %v332
    %v334 = vadd.f32 %v328, %v332
    %337 = vrot.lane.b32.xlu0 %v283, 32
    %v338 = vpop.permute.xlu0 %337
    %339 = vrot.lane.b32.xlu0 %v288, 32
    %v340 = vpop.permute.xlu0 %339
    %v343 = vsub.f32 %v164, %v338
    %v344 = vsub.f32 %v169, %v340
    %v345 = vmul.f32 %v283, %v283
    %v346 = vmul.f32 %v288, %v288
    %v347 = vsub.f32 %v303, %v345
    %v348 = vsub.f32 %v308, %v346
    %v349 = vadd.f32 %v347, 1e-05
    %v350 = vadd.f32 %v348, 1e-05
    %v351 = vrsqrt.pop %v349
    %v352 = vrsqrt.pop %v350
    %355 = vrot.lane.b32.xlu0 %v351, 32
    %v356 = vpop.permute.xlu0 %355
    %357 = vrot.lane.b32.xlu0 %v352, 32
    %v358 = vpop.permute.xlu0 %357
    %v361 = vmul.f32 %v343, %v356
    %v362 = vmul.f32 %v344, %v358
    %v363 = vlaneseq
    %v364 = vshrl.u32 %v363, 7
    %v365 = vsub.s32 4, %v364
    %v366 = vrot.slane %v42, %v365
    %368 = vrot.lane.b32.xlu0 %v366, 32
    %v369 = vpop.permute.xlu0 %368
    %v371 = vmul.f32 %v361, %v369
    %v372 = vmul.f32 %v362, %v369
    %v373 = vlaneseq
    %v374 = vshrl.u32 %v373, 7
    %v375 = vsub.s32 5, %v374
    %v376 = vrot.slane %v42, %v375
    %378 = vrot.lane.b32.xlu0 %v376, 32
    %v379 = vpop.permute.xlu0 %378
    %v381 = vadd.f32 %v371, %v379
    %v382 = vadd.f32 %v372, %v379
    %v383 = vld [vmem:[#allocation5 + $0x80] sm:$0xff]
    %v384 = vld [vmem:[#allocation5 + $0x88] sm:$0xff]
    %v385 = vld [vmem:[#allocation5 + $0x90] sm:$0xff]
    %v386 = vld [vmem:[#allocation5 + $0x98] sm:$0xff]
    %v387 = vld [vmem:[#allocation5 + $0xa0] sm:$0xff]
    %v388 = vld [vmem:[#allocation5 + $0xa8] sm:$0xff]
    %v389 = vld [vmem:[#allocation5 + $0xb0] sm:$0xff]
    %v390 = vld [vmem:[#allocation5 + $0xb8] sm:$0xff]
    %v391 = vld [vmem:[#allocation5 + $0xc0] sm:$0xff]
    %v392 = vld [vmem:[#allocation5 + $0xc8] sm:$0xff]
    %401 = vrot.lane.b32.xlu0 %v383, 32
    %v402 = vpop.permute.xlu0 %401
    %403 = vrot.lane.b32.xlu0 %v384, 32
    %v404 = vpop.permute.xlu0 %403
    %405 = vrot.lane.b32.xlu0 %v385, 32
    %v406 = vpop.permute.xlu0 %405
    %407 = vrot.lane.b32.xlu0 %v386, 32
    %v408 = vpop.permute.xlu0 %407
    %409 = vrot.lane.b32.xlu0 %v387, 32
    %v410 = vpop.permute.xlu0 %409
    %411 = vrot.lane.b32.xlu0 %v388, 32
    %v412 = vpop.permute.xlu0 %411
    %413 = vrot.lane.b32.xlu0 %v389, 32
    %v414 = vpop.permute.xlu0 %413
    %415 = vrot.lane.b32.xlu0 %v390, 32
    %v416 = vpop.permute.xlu0 %415
    %v425 = vmul.f32 %v381, %v402
    %v426 = vmul.f32 %v382, %v404
    %v427 = vmul.f32 %v381, %v406
    %v428 = vmul.f32 %v382, %v408
    %v429 = vmul.f32 %v381, %v410
    %v430 = vmul.f32 %v382, %v412
    %v431 = vmul.f32 %v381, %v414
    %v432 = vmul.f32 %v382, %v416
    %433 = vrot.lane.b32.xlu0 %v383, 64
    %v434 = vpop.permute.xlu0 %433
    %435 = vrot.lane.b32.xlu0 %v384, 64
    %v436 = vpop.permute.xlu0 %435
    %437 = vrot.lane.b32.xlu0 %v385, 64
    %v438 = vpop.permute.xlu0 %437
    %439 = vrot.lane.b32.xlu0 %v386, 64
    %v440 = vpop.permute.xlu0 %439
    %441 = vrot.lane.b32.xlu0 %v387, 64
    %v442 = vpop.permute.xlu0 %441
    %443 = vrot.lane.b32.xlu0 %v388, 64
    %v444 = vpop.permute.xlu0 %443
    %445 = vrot.lane.b32.xlu0 %v389, 64
    %v446 = vpop.permute.xlu0 %445
    %447 = vrot.lane.b32.xlu0 %v390, 64
    %v448 = vpop.permute.xlu0 %447
    %v457 = vmul.f32 %v164, %v434
    %v458 = vmul.f32 %v169, %v436
    %v459 = vmul.f32 %v164, %v438
    %v460 = vmul.f32 %v169, %v440
    %v461 = vmul.f32 %v164, %v442
    %v462 = vmul.f32 %v169, %v444
    %v463 = vmul.f32 %v164, %v446
    %v464 = vmul.f32 %v169, %v448
    %473 = vrot.lane.b32.xlu0 %v425, 96
    %v474 = vpop.permute.xlu0 %473
    %475 = vrot.lane.b32.xlu0 %v426, 96
    %v476 = vpop.permute.xlu0 %475
    %477 = vrot.lane.b32.xlu0 %v427, 96
    %v478 = vpop.permute.xlu0 %477
    %479 = vrot.lane.b32.xlu0 %v428, 96
    %v480 = vpop.permute.xlu0 %479
    %481 = vrot.lane.b32.xlu0 %v429, 96
    %v482 = vpop.permute.xlu0 %481
    %483 = vrot.lane.b32.xlu0 %v430, 96
    %v484 = vpop.permute.xlu0 %483
    %485 = vrot.lane.b32.xlu0 %v431, 96
    %v486 = vpop.permute.xlu0 %485
    %487 = vrot.lane.b32.xlu0 %v432, 96
    %v488 = vpop.permute.xlu0 %487
    %v490 = vsel %vm44, %v333, 0
    %v493 = vsel %vm44, %v334, 0
    %v495 = vsel %vm44, %v474, 0
    %v497 = vsel %vm44, %v476, 0
    %v499 = vsel %vm44, %v478, 0
    %v501 = vsel %vm44, %v480, 0
    %v503 = vsel %vm44, %v482, 0
    %v505 = vsel %vm44, %v484, 0
    %v507 = vsel %vm44, %v486, 0
    %v509 = vsel %vm44, %v488, 0
    %511 = vmatprep.subr.mxu0 0.0
    %512 = vmatpush1.xpose.msra.mxu0 %v495
    %513 = vmatprep.subr.mxu0 0.0
    %514 = vmatpush1.xpose.msra.mxu0 %v497
    %515 = vmatprep.subr.mxu0 0.0
    %516 = vmatpush1.xpose.msra.mxu0 %v499
    %517 = vmatprep.subr.mxu0 0.0
    %518 = vmatpush1.xpose.msra.mxu0 %v501
    %519 = vmatprep.subr.mxu0 0.0
    %520 = vmatpush1.xpose.msra.mxu0 %v503
    %521 = vmatprep.subr.mxu0 0.0
    %522 = vmatpush1.xpose.msra.mxu0 %v505
    %523 = vmatprep.subr.mxu0 0.0
    %524 = vmatpush1.xpose.msra.mxu0 %v507
    %525 = vmatprep.subr.mxu0 0.0
    %526 = vmatpush1.xpose.msra.mxu0 %v509
    %527 = vmatprep.subr.mxu0 0.0
    %528 = vmatpush1.xpose.msra.mxu0 0.0
    %529 = vmatprep.subr.mxu0 0.0
    %530 = vmatpush1.xpose.msra.mxu0 0.0
    %531 = vmatprep.subr.mxu0 0.0
    %532 = vmatpush1.xpose.msra.mxu0 0.0
    %533 = vmatprep.subr.mxu0 0.0
    %534 = vmatpush1.xpose.msra.mxu0 0.0
    %535 = vmatprep.subr.mxu0 0.0
    %536 = vmatpush1.xpose.msra.mxu0 0.0
    %537 = vmatprep.subr.mxu0 0.0
    %538 = vmatpush1.xpose.msra.mxu0 0.0
    %539 = vmatprep.subr.mxu0 0.0
    %540 = vmatpush1.xpose.msra.mxu0 0.0
    %541 = vmatprep.subr.mxu0 0.0
    %542 = vmatpush1.xpose.msra.mxu0 0.0
    %543 = vmatprep.subr.mxu0 0.0
    %544 = vmatpush1.xpose.msra.mxu0 0.0
    %545 = vmatprep.subr.mxu0 0.0
    %546 = vmatpush1.xpose.msra.mxu0 0.0
    %547 = vmatprep.subr.mxu0 0.0
    %548 = vmatpush1.xpose.msra.mxu0 0.0
    %549 = vmatprep.subr.mxu0 0.0
    %550 = vmatpush1.xpose.msra.mxu0 0.0
    %551 = vmatprep.subr.mxu0 0.0
    %552 = vmatpush1.xpose.msra.mxu0 0.0
    %553 = vmatprep.subr.mxu0 0.0
    %554 = vmatpush1.xpose.msra.mxu0 0.0
    %555 = vmatprep.subr.mxu0 0.0
    %556 = vmatpush1.xpose.msra.mxu0 0.0
    %557 = vmatprep.subr.mxu0 0.0
    %558 = vmatpush1.xpose.msra.mxu0 0.0
    %559 = vmatprep.subr.mxu0 0.0
    %560 = vmatpush1.xpose.msra.mxu0 0.0
    %561 = vmatprep.subr.mxu0 0.0
    %562 = vmatpush1.xpose.msra.mxu0 0.0
    %563 = vmatprep.subr.mxu0 0.0
    %564 = vmatpush1.xpose.msra.mxu0 0.0
    %565 = vmatprep.subr.mxu0 0.0
    %566 = vmatpush1.xpose.msra.mxu0 0.0
    %567 = vmatprep.subr.mxu0 0.0
    %568 = vmatpush1.xpose.msra.mxu0 0.0
    %569 = vmatprep.subr.mxu0 0.0
    %570 = vmatpush1.xpose.msra.mxu0 0.0
    %571 = vmatprep.subr.mxu0 0.0
    %572 = vmatpush1.xpose.msra.mxu0 0.0
    %573 = vmatprep.subr.mxu0 0.0
    %574 = vmatpush1.xpose.msra.mxu0 0.0
    %575 = vmatprep.mubr.f32.mxu0 0.0
    %576 = vmatmul.mubr.f32.gmra.mrb[0].mxu0 %v490
    %v577 = vpop.f32.mrb[0].mxu0
    %v578 = vadd.f32 %v391, %v577
    %v579 = vpop.f32.mrb[0].mxu0
    %580 = vmatprep.mubr.f32.mxu0 0.0
    %581 = vmatmul.mubr.f32.gmra.mrb[0].mxu0 %v493
    %v582 = vpop.f32.mrb[0].mxu0
    %v583 = vadd.f32 %v392, %v582
    %v584 = vpop.f32.mrb[0].mxu0
    %585 = vdwg.mxu0
    %vm586 = vcmask 523264
    %v587 = vsel %vm586, %v578, -inf
    %588 = vmax.xlane.f32.xlu0 %v587
    %v589 = vpop.xlane.xlu0 %588
    %v590 = vsel %vm586, %v583, -inf
    %591 = vmax.xlane.f32.xlu0 %v590
    %v592 = vpop.xlane.xlu0 %591
    %v593 = vsub.f32 %v578, %v589
    %v594 = vsub.f32 %v583, %v592
    %v595 = vmul.f32 %v593, 1.442695
    %v596 = vpow.pop %v595
    %v597 = vmul.f32 %v594, 1.442695
    %v598 = vpow.pop %v597
    %607 = vrot.lane.b32.xlu0 %v457, 96
    %v608 = vpop.permute.xlu0 %607
    %609 = vrot.lane.b32.xlu0 %v458, 96
    %v610 = vpop.permute.xlu0 %609
    %611 = vrot.lane.b32.xlu0 %v459, 96
    %v612 = vpop.permute.xlu0 %611
    %613 = vrot.lane.b32.xlu0 %v460, 96
    %v614 = vpop.permute.xlu0 %613
    %615 = vrot.lane.b32.xlu0 %v461, 96
    %v616 = vpop.permute.xlu0 %615
    %617 = vrot.lane.b32.xlu0 %v462, 96
    %v618 = vpop.permute.xlu0 %617
    %619 = vrot.lane.b32.xlu0 %v463, 96
    %v620 = vpop.permute.xlu0 %619
    %621 = vrot.lane.b32.xlu0 %v464, 96
    %v622 = vpop.permute.xlu0 %621
    %v631 = vsel %vm44, %v383, %v608
    %v632 = vsel %vm44, %v384, %v610
    %v633 = vsel %vm44, %v385, %v612
    %v634 = vsel %vm44, %v386, %v614
    %v635 = vsel %vm44, %v387, %v616
    %v636 = vsel %vm44, %v388, %v618
    %v637 = vsel %vm44, %v389, %v620
    %v638 = vsel %vm44, %v390, %v622
    %v640 = vsel %vm586, %v596, 0
    %v643 = vsel %vm586, %v598, 0
    %645 = vmatprep.subr.mxu0 0.0
    %646 = vmatpush1.msra.mxu0 %v631
    %647 = vmatprep.subr.mxu0 0.0
    %648 = vmatpush1.msra.mxu0 %v632
    %649 = vmatprep.subr.mxu0 0.0
    %650 = vmatpush1.msra.mxu0 %v633
    %651 = vmatprep.subr.mxu0 0.0
    %652 = vmatpush1.msra.mxu0 %v634
    %653 = vmatprep.subr.mxu0 0.0
    %654 = vmatpush1.msra.mxu0 %v635
    %655 = vmatprep.subr.mxu0 0.0
    %656 = vmatpush1.msra.mxu0 %v636
    %657 = vmatprep.subr.mxu0 0.0
    %658 = vmatpush1.msra.mxu0 %v637
    %659 = vmatprep.subr.mxu0 0.0
    %660 = vmatpush1.msra.mxu0 %v638
    %661 = vmatprep.subr.mxu0 0.0
    %662 = vmatpush1.msra.mxu0 0.0
    %663 = vmatprep.subr.mxu0 0.0
    %664 = vmatpush1.msra.mxu0 0.0
    %665 = vmatprep.subr.mxu0 0.0
    %666 = vmatpush1.msra.mxu0 0.0
    %667 = vmatprep.subr.mxu0 0.0
    %668 = vmatpush1.msra.mxu0 0.0
    %669 = vmatprep.subr.mxu0 0.0
    %670 = vmatpush1.msra.mxu0 0.0
    %671 = vmatprep.subr.mxu0 0.0
    %672 = vmatpush1.msra.mxu0 0.0
    %673 = vmatprep.subr.mxu0 0.0
    %674 = vmatpush1.msra.mxu0 0.0
    %675 = vmatprep.subr.mxu0 0.0
    %676 = vmatpush1.msra.mxu0 0.0
    %677 = vmatprep.subr.mxu0 0.0
    %678 = vmatpush1.msra.mxu0 0.0
    %679 = vmatprep.subr.mxu0 0.0
    %680 = vmatpush1.msra.mxu0 0.0
    %681 = vmatprep.subr.mxu0 0.0
    %682 = vmatpush1.msra.mxu0 0.0
    %683 = vmatprep.subr.mxu0 0.0
    %684 = vmatpush1.msra.mxu0 0.0
    %685 = vmatprep.subr.mxu0 0.0
    %686 = vmatpush1.msra.mxu0 0.0
    %687 = vmatprep.subr.mxu0 0.0
    %688 = vmatpush1.msra.mxu0 0.0
    %689 = vmatprep.subr.mxu0 0.0
    %690 = vmatpush1.msra.mxu0 0.0
    %691 = vmatprep.subr.mxu0 0.0
    %692 = vmatpush1.msra.mxu0 0.0
    %693 = vmatprep.subr.mxu0 0.0
    %694 = vmatpush1.msra.mxu0 0.0
    %695 = vmatprep.subr.mxu0 0.0
    %696 = vmatpush1.msra.mxu0 0.0
    %697 = vmatprep.subr.mxu0 0.0
    %698 = vmatpush1.msra.mxu0 0.0
    %699 = vmatprep.subr.mxu0 0.0
    %700 = vmatpush1.msra.mxu0 0.0
    %701 = vmatprep.subr.mxu0 0.0
    %702 = vmatpush1.msra.mxu0 0.0
    %703 = vmatprep.subr.mxu0 0.0
    %704 = vmatpush1.msra.mxu0 0.0
    %705 = vmatprep.subr.mxu0 0.0
    %706 = vmatpush1.msra.mxu0 0.0
    %707 = vmatprep.subr.mxu0 0.0
    %708 = vmatpush1.msra.mxu0 0.0
    %709 = vmatprep.mubr.f32.mxu0 0.0
    %710 = vmatmul.mubr.f32.gmra.mrb[0].mxu0 %v640
    %v711 = vpop.f32.mrb[0].mxu0
    %v712 = vadd.f32 0.0, %v711
    %v713 = vpop.f32.mrb[0].mxu0
    %714 = vmatprep.mubr.f32.mxu0 0.0
    %715 = vmatmul.mubr.f32.gmra.mrb[0].mxu0 %v643
    %v716 = vpop.f32.mrb[0].mxu0
    %v717 = vadd.f32 0.0, %v716
    %v718 = vpop.f32.mrb[0].mxu0
    %719 = vdwg.mxu0
    %722 = vrot.lane.b32.xlu0 %v712, 32
    %v723 = vpop.permute.xlu0 %722
    %724 = vrot.lane.b32.xlu0 %v717, 32
    %v725 = vpop.permute.xlu0 %724
    %v728 = vrcp.pop %v723
    %v729 = vmul.f32 %v712, %v728
    %v730 = vrcp.pop %v725
    %v731 = vmul.f32 %v717, %v730
    %734 = vrot.lane.b32.xlu0 %v729, 96
    %v735 = vpop.permute.xlu0 %734
    %736 = vrot.lane.b32.xlu0 %v731, 96
    %v737 = vpop.permute.xlu0 %736
    %742 = vrot.lane.b32.xlu0 %v87, 32
    %v743 = vpop.permute.xlu0 %742
    %744 = vrot.lane.b32.xlu0 %v88, 32
    %v745 = vpop.permute.xlu0 %744
    %746 = vrot.lane.b32.xlu0 %v89, 32
    %v747 = vpop.permute.xlu0 %746
    %748 = vrot.lane.b32.xlu0 %v90, 32
    %v749 = vpop.permute.xlu0 %748
    %v754 = vsel %vm44, %v735, 0
    %v756 = vsel %vm44, %v737, 0
    %758 = vmatprep.subr.mxu0 0.0
    %759 = vmatpush1.msra.mxu0 %v743
    %760 = vmatprep.subr.mxu0 0.0
    %761 = vmatpush1.msra.mxu0 %v745
    %762 = vmatprep.subr.mxu0 0.0
    %763 = vmatpush1.msra.mxu0 %v747
    %764 = vmatprep.subr.mxu0 0.0
    %765 = vmatpush1.msra.mxu0 %v749
    %766 = vmatprep.subr.mxu0 0.0
    %767 = vmatpush1.msra.mxu0 0.0
    %768 = vmatprep.subr.mxu0 0.0
    %769 = vmatpush1.msra.mxu0 0.0
    %770 = vmatprep.subr.mxu0 0.0
    %771 = vmatpush1.msra.mxu0 0.0
    %772 = vmatprep.subr.mxu0 0.0
    %773 = vmatpush1.msra.mxu0 0.0
    %774 = vmatprep.subr.mxu0 0.0
    %775 = vmatpush1.msra.mxu0 0.0
    %776 = vmatprep.subr.mxu0 0.0
    %777 = vmatpush1.msra.mxu0 0.0
    %778 = vmatprep.subr.mxu0 0.0
    %779 = vmatpush1.msra.mxu0 0.0
    %780 = vmatprep.subr.mxu0 0.0
    %781 = vmatpush1.msra.mxu0 0.0
    %782 = vmatprep.subr.mxu0 0.0
    %783 = vmatpush1.msra.mxu0 0.0
    %784 = vmatprep.subr.mxu0 0.0
    %785 = vmatpush1.msra.mxu0 0.0
    %786 = vmatprep.subr.mxu0 0.0
    %787 = vmatpush1.msra.mxu0 0.0
    %788 = vmatprep.subr.mxu0 0.0
    %789 = vmatpush1.msra.mxu0 0.0
    %790 = vmatprep.subr.mxu0 0.0
    %791 = vmatpush1.msra.mxu0 0.0
    %792 = vmatprep.subr.mxu0 0.0
    %793 = vmatpush1.msra.mxu0 0.0
    %794 = vmatprep.subr.mxu0 0.0
    %795 = vmatpush1.msra.mxu0 0.0
    %796 = vmatprep.subr.mxu0 0.0
    %797 = vmatpush1.msra.mxu0 0.0
    %798 = vmatprep.subr.mxu0 0.0
    %799 = vmatpush1.msra.mxu0 0.0
    %800 = vmatprep.subr.mxu0 0.0
    %801 = vmatpush1.msra.mxu0 0.0
    %802 = vmatprep.subr.mxu0 0.0
    %803 = vmatpush1.msra.mxu0 0.0
    %804 = vmatprep.subr.mxu0 0.0
    %805 = vmatpush1.msra.mxu0 0.0
    %806 = vmatprep.subr.mxu0 0.0
    %807 = vmatpush1.msra.mxu0 0.0
    %808 = vmatprep.subr.mxu0 0.0
    %809 = vmatpush1.msra.mxu0 0.0
    %810 = vmatprep.subr.mxu0 0.0
    %811 = vmatpush1.msra.mxu0 0.0
    %812 = vmatprep.subr.mxu0 0.0
    %813 = vmatpush1.msra.mxu0 0.0
    %814 = vmatprep.subr.mxu0 0.0
    %815 = vmatpush1.msra.mxu0 0.0
    %816 = vmatprep.subr.mxu0 0.0
    %817 = vmatpush1.msra.mxu0 0.0
    %818 = vmatprep.subr.mxu0 0.0
    %819 = vmatpush1.msra.mxu0 0.0
    %820 = vmatprep.subr.mxu0 0.0
    %821 = vmatpush1.msra.mxu0 0.0
    %822 = vmatprep.mubr.f32.mxu0 0.0
    %823 = vmatmul.mubr.f32.gmra.mrb[0].mxu0 %v754
    %v824 = vpop.f32.mrb[0].mxu0
    %v825 = vadd.f32 0.0, %v824
    %v826 = vpop.f32.mrb[0].mxu0
    %827 = vmatprep.mubr.f32.mxu0 0.0
    %828 = vmatmul.mubr.f32.gmra.mrb[0].mxu0 %v756
    %v829 = vpop.f32.mrb[0].mxu0
    %v830 = vadd.f32 0.0, %v829
    %v831 = vpop.f32.mrb[0].mxu0
    %832 = vdwg.mxu0
    %v833 = vadd.f32 %v40, %v825
    %v834 = vadd.f32 %v41, %v830
    %v835 = vlaneseq
    %v836 = vshrl.u32 %v835, 7
    %v837 = vsub.s32 6, %v836
    %v838 = vrot.slane %v42, %v837
    %v839 = vadd.f32 %v833, %v838
    %v840 = vadd.f32 %v834, %v838
    %v841 = vsel %vm44, %v839, 0.0
    %842 = vadd.xlane.f32.xlu0 %v841
    %v843 = vpop.xlane.xlu0 %842
    %v844 = vsel %vm44, %v840, 0.0
    %845 = vadd.xlane.f32.xlu0 %v844
    %v846 = vpop.xlane.xlu0 %845
    %v847 = vmul.f32 %v839, %v839
    %v848 = vmul.f32 %v840, %v840
    %v849 = vsel %vm44, %v847, 0.0
    %850 = vadd.xlane.f32.xlu0 %v849
    %v851 = vpop.xlane.xlu0 %850
    %v852 = vsel %vm44, %v848, 0.0
    %853 = vadd.xlane.f32.xlu0 %v852
    %v854 = vpop.xlane.xlu0 %853
    %v855 = vmul.f32 %v843, 0.03125
    %v856 = vmul.f32 %v846, 0.03125
    %v857 = vmul.f32 %v851, 0.03125
    %v858 = vmul.f32 %v854, 0.03125
    %v859 = vmul.f32 %v855, %v855
    %v860 = vmul.f32 %v856, %v856
    %v861 = vsub.f32 %v857, %v859
    %v862 = vsub.f32 %v858, %v860
    %v863 = vsub.f32 %v839, %v855
    %v864 = vsub.f32 %v840, %v856
    %v865 = vadd.f32 %v861, 1e-05
    %v866 = vadd.f32 %v862, 1e-05
    %v867 = vrsqrt.pop %v865
    %v868 = vrsqrt.pop %v866
    %v869 = vmul.f32 %v863, %v867
    %v870 = vmul.f32 %v864, %v868
    %v871 = vlaneseq
    %v872 = vshrl.u32 %v871, 7
    %v873 = vsub.s32 7, %v872
    %v874 = vrot.slane %v42, %v873
    %v875 = vmul.f32 %v869, %v874
    %v876 = vmul.f32 %v870, %v874
    %v877 = vlaneseq
    %v878 = vshrl.u32 %v877, 7
    %v879 = vsub.s32 0, %v878
    %v880 = vrot.slane %v43, %v879
    %v881 = vadd.f32 %v875, %v880
    %v882 = vadd.f32 %v876, %v880
    %v883 = vld [vmem:[#allocation5 + $0x20] sm:$0xff]
    %v884 = vld [vmem:[#allocation5 + $0x28] sm:$0xff]
    %v885 = vld [vmem:[#allocation5 + $0x30] sm:$0xff]
    %v886 = vld [vmem:[#allocation5 + $0x38] sm:$0xff]
    %v887 = vlaneseq
    %v888 = vshrl.u32 %v887, 7
    %v889 = vsub.s32 2, %v888
    %v890 = vrot.slane %v43, %v889
    %v892 = vsel %vm44, %v881, 0
    %v895 = vsel %vm44, %v882, 0
    %897 = vmatprep.subr.mxu0 0.0
    %898 = vmatpush1.msra.mxu0 %v883
    %899 = vmatprep.subr.mxu0 0.0
    %900 = vmatpush1.msra.mxu0 %v884
    %901 = vmatprep.subr.mxu0 0.0
    %902 = vmatpush1.msra.mxu0 %v885
    %903 = vmatprep.subr.mxu0 0.0
    %904 = vmatpush1.msra.mxu0 %v886
    %905 = vmatprep.subr.mxu0 0.0
    %906 = vmatpush1.msra.mxu0 0.0
    %907 = vmatprep.subr.mxu0 0.0
    %908 = vmatpush1.msra.mxu0 0.0
    %909 = vmatprep.subr.mxu0 0.0
    %910 = vmatpush1.msra.mxu0 0.0
    %911 = vmatprep.subr.mxu0 0.0
    %912 = vmatpush1.msra.mxu0 0.0
    %913 = vmatprep.subr.mxu0 0.0
    %914 = vmatpush1.msra.mxu0 0.0
    %915 = vmatprep.subr.mxu0 0.0
    %916 = vmatpush1.msra.mxu0 0.0
    %917 = vmatprep.subr.mxu0 0.0
    %918 = vmatpush1.msra.mxu0 0.0
    %919 = vmatprep.subr.mxu0 0.0
    %920 = vmatpush1.msra.mxu0 0.0
    %921 = vmatprep.subr.mxu0 0.0
    %922 = vmatpush1.msra.mxu0 0.0
    %923 = vmatprep.subr.mxu0 0.0
    %924 = vmatpush1.msra.mxu0 0.0
    %925 = vmatprep.subr.mxu0 0.0
    %926 = vmatpush1.msra.mxu0 0.0
    %927 = vmatprep.subr.mxu0 0.0
    %928 = vmatpush1.msra.mxu0 0.0
    %929 = vmatprep.subr.mxu0 0.0
    %930 = vmatpush1.msra.mxu0 0.0
    %931 = vmatprep.subr.mxu0 0.0
    %932 = vmatpush1.msra.mxu0 0.0
    %933 = vmatprep.subr.mxu0 0.0
    %934 = vmatpush1.msra.mxu0 0.0
    %935 = vmatprep.subr.mxu0 0.0
    %936 = vmatpush1.msra.mxu0 0.0
    %937 = vmatprep.subr.mxu0 0.0
    %938 = vmatpush1.msra.mxu0 0.0
    %939 = vmatprep.subr.mxu0 0.0
    %940 = vmatpush1.msra.mxu0 0.0
    %941 = vmatprep.subr.mxu0 0.0
    %942 = vmatpush1.msra.mxu0 0.0
    %943 = vmatprep.subr.mxu0 0.0
    %944 = vmatpush1.msra.mxu0 0.0
    %945 = vmatprep.subr.mxu0 0.0
    %946 = vmatpush1.msra.mxu0 0.0
    %947 = vmatprep.subr.mxu0 0.0
    %948 = vmatpush1.msra.mxu0 0.0
    %949 = vmatprep.subr.mxu0 0.0
    %950 = vmatpush1.msra.mxu0 0.0
    %951 = vmatprep.subr.mxu0 0.0
    %952 = vmatpush1.msra.mxu0 0.0
    %953 = vmatprep.subr.mxu0 0.0
    %954 = vmatpush1.msra.mxu0 0.0
    %955 = vmatprep.subr.mxu0 0.0
    %956 = vmatpush1.msra.mxu0 0.0
    %957 = vmatprep.subr.mxu0 0.0
    %958 = vmatpush1.msra.mxu0 0.0
    %959 = vmatprep.subr.mxu0 0.0
    %960 = vmatpush1.msra.mxu0 0.0
    %961 = vmatprep.mubr.f32.mxu0 0.0
    %962 = vmatmul.mubr.f32.gmra.mrb[0].mxu0 %v892
    %v963 = vpop.f32.mrb[0].mxu0
    %v964 = vadd.f32 %v890, %v963
    %v965 = vpop.f32.mrb[0].mxu0
    %966 = vmatprep.mubr.f32.mxu0 0.0
    %967 = vmatmul.mubr.f32.gmra.mrb[0].mxu0 %v895
    %v968 = vpop.f32.mrb[0].mxu0
    %v969 = vadd.f32 %v890, %v968
    %v970 = vpop.f32.mrb[0].mxu0
    %971 = vdwg.mxu0
    %v972 = vmul.f32 %v964, 0.5
    %v973 = vmul.f32 %v969, 0.5
    %v974 = vmul.f32 %v964, 0.70710677
    %v975 = vmul.f32 %v969, 0.70710677
    %v976 = verf.f32.pop %v974
    %v977 = verf.f32.pop %v975
    %v978 = vadd.f32 %v976, 1.0
    %v979 = vadd.f32 %v977, 1.0
    %v980 = vmul.f32 %v972, %v978
    %v981 = vmul.f32 %v973, %v979
    %v982 = vld [vmem:[#allocation5 + $0x40] sm:$0xff]
    %v983 = vld [vmem:[#allocation5 + $0x48] sm:$0xff]
    %v984 = vld [vmem:[#allocation5 + $0x50] sm:$0xff]
    %v985 = vld [vmem:[#allocation5 + $0x58] sm:$0xff]
    %v986 = vlaneseq
    %v987 = vshrl.u32 %v986, 7
    %v988 = vsub.s32 1, %v987
    %v989 = vrot.slane %v43, %v988
    %990 = vmatprep.subr.mxu0 0.0
    %991 = vmatpush1.xpose.msra.mxu0 %v982
    %992 = vmatprep.subr.mxu0 0.0
    %993 = vmatpush1.xpose.msra.mxu0 %v983
    %994 = vmatprep.subr.mxu0 0.0
    %995 = vmatpush1.xpose.msra.mxu0 %v984
    %996 = vmatprep.subr.mxu0 0.0
    %997 = vmatpush1.xpose.msra.mxu0 %v985
    %998 = vmatprep.subr.mxu0 0.0
    %999 = vmatpush1.xpose.msra.mxu0 0.0
    %1000 = vmatprep.subr.mxu0 0.0
    %1001 = vmatpush1.xpose.msra.mxu0 0.0
    %1002 = vmatprep.subr.mxu0 0.0
    %1003 = vmatpush1.xpose.msra.mxu0 0.0
    %1004 = vmatprep.subr.mxu0 0.0
    %1005 = vmatpush1.xpose.msra.mxu0 0.0
    %1006 = vmatprep.subr.mxu0 0.0
    %1007 = vmatpush1.xpose.msra.mxu0 0.0
    %1008 = vmatprep.subr.mxu0 0.0
    %1009 = vmatpush1.xpose.msra.mxu0 0.0
    %1010 = vmatprep.subr.mxu0 0.0
    %1011 = vmatpush1.xpose.msra.mxu0 0.0
    %1012 = vmatprep.subr.mxu0 0.0
    %1013 = vmatpush1.xpose.msra.mxu0 0.0
    %1014 = vmatprep.subr.mxu0 0.0
    %1015 = vmatpush1.xpose.msra.mxu0 0.0
    %1016 = vmatprep.subr.mxu0 0.0
    %1017 = vmatpush1.xpose.msra.mxu0 0.0
    %1018 = vmatprep.subr.mxu0 0.0
    %1019 = vmatpush1.xpose.msra.mxu0 0.0
    %1020 = vmatprep.subr.mxu0 0.0
    %1021 = vmatpush1.xpose.msra.mxu0 0.0
    %1022 = vmatprep.subr.mxu0 0.0
    %1023 = vmatpush1.xpose.msra.mxu0 0.0
    %1024 = vmatprep.subr.mxu0 0.0
    %1025 = vmatpush1.xpose.msra.mxu0 0.0
    %1026 = vmatprep.subr.mxu0 0.0
    %1027 = vmatpush1.xpose.msra.mxu0 0.0
    %1028 = vmatprep.subr.mxu0 0.0
    %1029 = vmatpush1.xpose.msra.mxu0 0.0
    %1030 = vmatprep.subr.mxu0 0.0
    %1031 = vmatpush1.xpose.msra.mxu0 0.0
    %1032 = vmatprep.subr.mxu0 0.0
    %1033 = vmatpush1.xpose.msra.mxu0 0.0
    %1034 = vmatprep.subr.mxu0 0.0
    %1035 = vmatpush1.xpose.msra.mxu0 0.0
    %1036 = vmatprep.subr.mxu0 0.0
    %1037 = vmatpush1.xpose.msra.mxu0 0.0
    %1038 = vmatprep.subr.mxu0 0.0
    %1039 = vmatpush1.xpose.msra.mxu0 0.0
    %1040 = vmatprep.subr.mxu0 0.0
    %1041 = vmatpush1.xpose.msra.mxu0 0.0
    %1042 = vmatprep.subr.mxu0 0.0
    %1043 = vmatpush1.xpose.msra.mxu0 0.0
    %1044 = vmatprep.subr.mxu0 0.0
    %1045 = vmatpush1.xpose.msra.mxu0 0.0
    %1046 = vmatprep.subr.mxu0 0.0
    %1047 = vmatpush1.xpose.msra.mxu0 0.0
    %1048 = vmatprep.subr.mxu0 0.0
    %1049 = vmatpush1.xpose.msra.mxu0 0.0
    %1050 = vmatprep.subr.mxu0 0.0
    %1051 = vmatpush1.xpose.msra.mxu0 0.0
    %1052 = vmatprep.subr.mxu0 0.0
    %1053 = vmatpush1.xpose.msra.mxu0 0.0
    %1054 = vmatprep.mubr.f32.mxu0 0.0
    %1055 = vmatmul.mubr.f32.gmra.mrb[0].mxu0 %v980
    %v1056 = vpop.f32.mrb[0].mxu0
    %v1057 = vadd.f32 %v989, %v1056
    %v1058 = vpop.f32.mrb[0].mxu0
    %1059 = vmatprep.mubr.f32.mxu0 0.0
    %1060 = vmatmul.mubr.f32.gmra.mrb[0].mxu0 %v981
    %v1061 = vpop.f32.mrb[0].mxu0
    %v1062 = vadd.f32 %v989, %v1061
    %v1063 = vpop.f32.mrb[0].mxu0
    %1064 = vdwg.mxu0
    %v1065 = vadd.f32 %v839, %v1057
    %v1066 = vadd.f32 %v840, %v1062
    %1067 = vst.msk [vmem:[#allocation7] sm:$0xff] %vm44, %v1065
    %1068 = vst.msk [vmem:[#allocation7 + $0x8] sm:$0xff] %vm44, %v1066
    // Predicated region
    $region18: #{tpu_custom_call.1} parent=1 // pred_check
      _
    $region19: #{tpu_custom_call.1} parent=1 // pred_check_branch
      %1070 = sbr.rel (0) target = $region21
    $region20: #{tpu_custom_call.1} parent=1 // pred_region
      %s1072 = ssub.s32 256, 256
      %1073 = vsyncadd [#allocation4], %s1072
      %s1074 = sshll.u32 [#allocation7], 4
      %s1075 = int_to_ptr.vmem [resolvable:$true] %s1074
      %1080 = dma.vmem_to_hbm [thread:$0]  %s1075, 256, %s2, [#allocation4], 128, 128, 8
    $region21: #{tpu_custom_call.1} parent=1 // pred_fallthru
      _
    // Predicated region
    $region22: #{tpu_custom_call.1} parent=1 // pred_check
      _
    $region23: #{tpu_custom_call.1} parent=1 // pred_check_branch
      %1082 = sbr.rel (0) target = $region25
    $region24: #{tpu_custom_call.1} parent=1 // pred_region
      %1083 = dma.done [#allocation4], 256
    $region25: #{tpu_custom_call.1} parent=1 // pred_fallthru
      _
    %1084 = vsyncpa [#allocation3], 1
    %1085 = vsyncpa [#allocation6], 1
    %1086 = vsyncpa [#allocation4], 1

</llo_original>
